<compile_context>
chip_gen: v6e
topology: v6e:2x2x1
jax: 0.10.0
libtpu: 0.0.40
codegen_flags: <defaults>
</compile_context>

<pallas_src>
import math

import jax
import jax.numpy as jnp
from jax.experimental import pallas as pl
from jax.experimental.pallas import tpu as pltpu

PACK = 8            # original rows packed into one lane-dense packed row
TM_PACKED = 2048    # target packed-row tile (~2 MiB f32 input per grid step)
MIN_TM = 256        # below this per-step overhead dominates; don't split


def _round_up(x, m):
    return ((x + m - 1) // m) * m


def _choose_tm(m_rows):
    """Packed-row tile: as big as useful, and an EVEN number of tiles so the
    megacore split on v7x is balanced (harmless on single-TC v5e/v6e)."""
    if m_rows <= 2 * MIN_TM:
        return _round_up(m_rows, 8)             # single tile for small inputs
    pairs = pl.cdiv(m_rows, 2 * TM_PACKED)      # number of tile PAIRS
    return _round_up(pl.cdiv(m_rows, 2 * pairs), 8)


def _linear_kernel(x_ref, w_ref, b_ref, o_ref):
    # x_ref: (tm, PACK*in_c) f32  -> bf16 cast fused here (no wrapper HBM pass)
    # w_ref: (PACK*in_c, PACK*out_c) bf16 block-diagonal, resident
    # b_ref: (1, PACK*out_c) f32, resident
    # o_ref: (tm, PACK*out_c) f32, lane-dense (128 wide -> unmasked stores)
    x = x_ref[...].astype(jnp.bfloat16)          # VPU cast adjacent to the dot
    acc = jnp.dot(x, w_ref[...], preferred_element_type=jnp.float32)
    o_ref[...] = acc + b_ref[...]                # f32 bias add, f32 output


def pack_params(weight, bias):
    """One-time packing of nn.Linear params (PyTorch layout: weight (out_c, in_c)).

    Returns a block-diagonal bf16 weight (PACK*in_c, PACK*out_c) and a tiled
    f32 bias (1, PACK*out_c) so the kernel consumes lane-dense operands and
    emits a lane-dense 128-wide output slab. Done once, outside the hot path.
    """
    out_c, in_c = weight.shape
    w = weight.T.astype(jnp.bfloat16)                      # (in_c, out_c)
    eye = jnp.eye(PACK, dtype=jnp.bfloat16)
    w_packed = jnp.einsum("pq,io->piqo", eye, w).reshape(PACK * in_c,
                                                         PACK * out_c)
    b_packed = jnp.tile(bias.astype(jnp.float32), PACK).reshape(1, PACK * out_c)
    return w_packed, b_packed


def baseline_forward(flow_x, w_packed, b_packed):
    """flow_x: (B, N, T, F). Returns (B, N, 1, out_c) f32, matching
    Linear(flow_x.view(B, N, -1)).unsqueeze(2)."""
    B, N = flow_x.shape[0], flow_x.shape[1]
    in_c = math.prod(flow_x.shape[2:])          # static Python int, no sync
    Kp, Np = w_packed.shape
    out_c = Np // PACK
    assert Kp == PACK * in_c, (Kp, PACK, in_c)

    M = B * N
    m_pack = pl.cdiv(M, PACK)                   # packed rows needed
    m_rows = max(m_pack, 8)                     # >= one full 8-sublane block
    tm = _choose_tm(m_rows)
    grid_m = pl.cdiv(m_rows, tm)                # ragged last block OK (masked)

    # Lane-dense f32 input slab (the bf16 cast happens in-kernel).  When M is
    # a multiple of PACK this is a pure reshape: no pad, no copy.
    x2d = flow_x.reshape(M, in_c)
    pad_rows = m_rows * PACK - M
    if pad_rows:
        x2d = jnp.pad(x2d, ((0, pad_rows), (0, 0)))
    x_packed = x2d.reshape(m_rows, Kp)

    cost = pl.CostEstimate(
        flops=2 * m_rows * Kp * Np,
        bytes_accessed=(m_rows * Kp * 4          # f32 input stream
                        + Kp * Np * 2            # resident bf16 weight
                        + Np * 4                 # bias
                        + m_rows * Np * 4),      # f32 output stream
        transcendentals=0,
    )

    out_packed = pl.pallas_call(
        _linear_kernel,
        out_shape=jax.ShapeDtypeStruct((m_rows, Np), jnp.float32),
        grid_spec=pltpu.PrefetchScalarGridSpec(
            num_scalar_prefetch=0,
            grid=(grid_m,),
            in_specs=[
                pl.BlockSpec((tm, Kp), lambda i: (i, 0)),   # streamed rows
                pl.BlockSpec((Kp, Np), lambda i: (0, 0)),   # resident weight
                pl.BlockSpec((1, Np), lambda i: (0, 0)),    # resident bias
            ],
            out_specs=pl.BlockSpec((tm, Np), lambda i: (i, 0)),
        ),
        compiler_params=pltpu.CompilerParams(
            # megacore sharding of row tiles on v7x; harmless on v5e/v6e
            dimension_semantics=("parallel",),
            vmem_limit_bytes=32 * 1024 * 1024,
        ),
        cost_estimate=cost,
    )(x_packed, w_packed, b_packed)

    # Unpack the lane-dense slab back to (B, N, 1, out_c): plain-JAX plumbing.
    out2d = out_packed.reshape(m_rows * PACK, out_c)
    if pad_rows:
        out2d = out2d[:M]                       # only when padding existed
    return out2d.reshape(B, N, 1, out_c)


if __name__ == "__main__":
    # Small shapes consistent with the module: flow_x (B, N, T, F)
    B, N, T, F = 2, 16, 8, 4
    in_c, out_c = T * F, 16

    key = jax.random.PRNGKey(0)
    kx, kw, kb = jax.random.split(key, 3)
    flow_x = jax.random.normal(kx, (B, N, T, F), dtype=jnp.float32)

    # Deterministic params (mirrors nn.Linear's uniform(-1/sqrt(in_c), ...))
    bound = 1.0 / math.sqrt(in_c)
    weight = jax.random.uniform(kw, (out_c, in_c), jnp.float32, -bound, bound)
    bias = jax.random.uniform(kb, (out_c,), jnp.float32, -bound, bound)

    w_packed, b_packed = pack_params(weight, bias)      # packed once, reused
    fwd = jax.jit(baseline_forward)
    wb = weight.astype(jnp.bfloat16).astype(jnp.float32)

    def ref_bf16(x, Bi, Ni):
        x2d = x.reshape(Bi * Ni, in_c)
        xb = x2d.astype(jnp.bfloat16).astype(jnp.float32)
        return (xb @ wb.T + bias).reshape(Bi, Ni, 1, out_c)

    # Case 1: tiny shape (single tile, padded to one 8-sublane block).
    out = fwd(flow_x, w_packed, b_packed)
    jax.block_until_ready(out)
    r1 = ref_bf16(flow_x, B, N)
    ref_f32 = (flow_x.reshape(B * N, in_c) @ weight.T + bias
               ).reshape(B, N, 1, out_c)
    assert out.shape == (B, N, 1, out_c), out.shape
    assert jnp.allclose(out, r1, atol=2e-3, rtol=2e-3), \
        float(jnp.max(jnp.abs(out - r1)))
    assert jnp.allclose(out, ref_f32, atol=5e-2, rtol=5e-2), \
        float(jnp.max(jnp.abs(out - ref_f32)))

    # Case 2: realistic traffic shape — 2 balanced tiles, ragged last block.
    B2, N2 = 16, 307
    flow_x2 = jax.random.normal(jax.random.PRNGKey(1), (B2, N2, T, F),
                                dtype=jnp.float32)
    out2 = fwd(flow_x2, w_packed, b_packed)
    jax.block_until_ready(out2)
    r2 = ref_bf16(flow_x2, B2, N2)
    assert out2.shape == (B2, N2, 1, out_c), out2.shape
    assert jnp.allclose(out2, r2, atol=2e-3, rtol=2e-3), \
        float(jnp.max(jnp.abs(out2 - r2)))

    # Case 3: M not a multiple of PACK — exercises the pad + output slice path.
    B3, N3 = 3, 5
    flow_x3 = jax.random.normal(jax.random.PRNGKey(2), (B3, N3, T, F),
                                dtype=jnp.float32)
    out3 = fwd(flow_x3, w_packed, b_packed)
    jax.block_until_ready(out3)
    r3 = ref_bf16(flow_x3, B3, N3)
    assert out3.shape == (B3, N3, 1, out_c), out3.shape
    assert jnp.allclose(out3, r3, atol=2e-3, rtol=2e-3), \
        float(jnp.max(jnp.abs(out3 - r3)))

    # Case 4: large M — exercises the big (2048 packed-row) tile, grid_m = 2.
    B4, N4 = 8, 4096
    flow_x4 = jax.random.normal(jax.random.PRNGKey(3), (B4, N4, T, F),
                                dtype=jnp.float32)
    out4 = fwd(flow_x4, w_packed, b_packed)
    jax.block_until_ready(out4)
    r4 = ref_bf16(flow_x4, B4, N4)
    assert out4.shape == (B4, N4, 1, out_c), out4.shape
    assert jnp.allclose(out4, r4, atol=2e-3, rtol=2e-3), \
        float(jnp.max(jnp.abs(out4 - r4)))

    print("KERNEL_OK")
</pallas_src>

<mosaic_0001>
module attributes {stable_mosaic.version = 11 : i64} {
  func.func @_linear_kernel(%arg0: i32, %arg1: memref<8x256xf32, #tpu.memory_space<vmem>>, %arg2: memref<256x128xbf16, #tpu.memory_space<vmem>>, %arg3: memref<1x128xf32, #tpu.memory_space<vmem>>, %arg4: memref<8x128xf32, #tpu.memory_space<vmem>>) attributes {dimension_semantics = [#tpu.dimension_semantics<parallel>], iteration_bounds = array<i64: 1>, scalar_prefetch = 0 : i64, scratch_operands = 0 : i64, tpu.core_type = #tpu.core_type<tc>, window_params = [{transform_indices = @transform_0, window_bounds = array<i64: 8, 256>}, {pipeline_mode = #tpu.pipeline_mode<synchronous>, transform_indices = @transform_1, window_bounds = array<i64: 256, 128>}, {pipeline_mode = #tpu.pipeline_mode<synchronous>, transform_indices = @transform_2, window_bounds = array<i64: 1, 128>}, {transform_indices = @transform_3, window_bounds = array<i64: 8, 128>}]} {
    %c0 = arith.constant 0 : index
    %c0_0 = arith.constant 0 : index
    %0 = vector.load %arg1[%c0, %c0_0] : memref<8x256xf32, #tpu.memory_space<vmem>>, vector<8x256xf32>
    %1 = arith.truncf %0 : vector<8x256xf32> to vector<8x256xbf16>
    %c0_1 = arith.constant 0 : index
    %c0_2 = arith.constant 0 : index
    %2 = vector.load %arg2[%c0_1, %c0_2] : memref<256x128xbf16, #tpu.memory_space<vmem>>, vector<256x128xbf16>
    %cst = arith.constant dense<0.000000e+00> : vector<8x128xf32>
    %3 = tpu.matmul %1, %2, %cst {dimension_numbers = #tpu.dot_dimension_numbers<[1], [0], [0], [1], [0, 0, 1, 1], [], []>} : vector<8x256xbf16>, vector<256x128xbf16>, vector<8x128xf32> -> vector<8x128xf32>
    %c0_3 = arith.constant 0 : index
    %c0_4 = arith.constant 0 : index
    %4 = vector.load %arg3[%c0_3, %c0_4] : memref<1x128xf32, #tpu.memory_space<vmem>>, vector<1x128xf32>
    %5 = vector.broadcast %4 : vector<1x128xf32> to vector<8x128xf32>
    %6 = arith.addf %3, %5 : vector<8x128xf32>
    %c0_5 = arith.constant 0 : index
    %c0_6 = arith.constant 0 : index
    %7 = vector.load %arg4[%c0_5, %c0_6] : memref<8x128xf32, #tpu.memory_space<vmem>>, vector<8x128xf32>
    tpu.vector_store %arg4[%c0_5, %c0_6], %6 {strides = array<i32>} : memref<8x128xf32, #tpu.memory_space<vmem>>, vector<8x128xf32>,
    return
  }
  func.func @transform_0(%arg0: i32) -> (i32, i32) {
    %c0_i32 = arith.constant 0 : i32
    %c0_i32_0 = arith.constant 0 : i32
    return %arg0, %c0_i32 : i32, i32
  }
  func.func @transform_1(%arg0: i32) -> (i32, i32) {
    %c0_i32 = arith.constant 0 : i32
    %c0_i32_0 = arith.constant 0 : i32
    %c0_i32_1 = arith.constant 0 : i32
    return %c0_i32, %c0_i32_0 : i32, i32
  }
  func.func @transform_2(%arg0: i32) -> (i32, i32) {
    %c0_i32 = arith.constant 0 : i32
    %c0_i32_0 = arith.constant 0 : i32
    %c0_i32_1 = arith.constant 0 : i32
    return %c0_i32, %c0_i32_0 : i32, i32
  }
  func.func @transform_3(%arg0: i32) -> (i32, i32) {
    %c0_i32 = arith.constant 0 : i32
    %c0_i32_0 = arith.constant 0 : i32
    return %arg0, %c0_i32 : i32, i32
  }
}

</mosaic_0001>

<llo_original>
// kernel: baseline_forward.1
$region0: #{baseline_forward.1}
  #allocation0 [shape = 'u32[]', space=smem, size = 0x4, offset = 0x4, fixed_abs, tag = 'smem constant byte address 0x4 - core index']
  #allocation1 [shape = 'u32[144,128]{1,0:T(1,128)}', space=vmem, size = 0x12000, scoped, tag = 'internal scratch']
  %s0 = inlined_call_operand.vmem [shape: f32[8,256], index: 0, kind: input, shape index: {}]
  %s1 = inlined_call_operand.vmem [shape: bf16[256,128], index: 1, kind: input, shape index: {}]
  %s2 = inlined_call_operand.vmem [shape: f32[1,128], index: 2, kind: input, shape index: {}]
  %s3 = inlined_call_operand.vmem [shape: f32[8,128], index: 3, kind: output, shape index: {}]
  %s4 = sld [smem:[#allocation0]]
  $region22: #{baseline_forward.1} parent=0
    _
  %s6 = ssub.s32 1, %s4
  %s7 = scalar_select 0, %s6, %s4
  // Predicated region
  $region2: #{baseline_forward.1} parent=0 // pred_check
    _
  $region3: #{baseline_forward.1} parent=0 // pred_check_branch
    %9 = sbr.rel (0) target = $region5
  $region4: #{baseline_forward.1} parent=0 // pred_region
    _
  $region5: #{baseline_forward.1} parent=0 // pred_fallthru
    _
  // Predicated region
  $region6: #{baseline_forward.1} parent=0 // pred_check
    _
  $region7: #{baseline_forward.1} parent=0 // pred_check_branch
    %11 = sbr.rel (0) target = $region9
  $region8: #{baseline_forward.1} parent=0 // pred_region
    _
  $region9: #{baseline_forward.1} parent=0 // pred_fallthru
    _
  // Predicated region
  $region10: #{baseline_forward.1} parent=0 // pred_check
    _
  $region11: #{baseline_forward.1} parent=0 // pred_check_branch
    %13 = sbr.rel (0) target = $region13
  $region12: #{baseline_forward.1} parent=0 // pred_region
    _
  $region13: #{baseline_forward.1} parent=0 // pred_fallthru
    _
  %v15 = vld [vmem:[%s0] sm:$0xff]
  %v16 = vld [vmem:[%s0 + $0x8] sm:$0xff]
  %v17 = vpack.c.bf16 %v15, %v15
  %v18 = vpack.c.bf16 %v16, %v16
  %v19 = vld [vmem:[%s1] sm:$0xf]
  %v20 = vld [vmem:[%s1 + $0x4] sm:$0xf]
  %v21 = vld [vmem:[%s1 + $0x8] sm:$0xf]
  %v22 = vld [vmem:[%s1 + $0xc] sm:$0xf]
  %v23 = vld [vmem:[%s1 + $0x10] sm:$0xf]
  %v24 = vld [vmem:[%s1 + $0x14] sm:$0xf]
  %v25 = vld [vmem:[%s1 + $0x18] sm:$0xf]
  %v26 = vld [vmem:[%s1 + $0x1c] sm:$0xf]
  %v27 = vld [vmem:[%s1 + $0x20] sm:$0xf]
  %v28 = vld [vmem:[%s1 + $0x24] sm:$0xf]
  %v29 = vld [vmem:[%s1 + $0x28] sm:$0xf]
  %v30 = vld [vmem:[%s1 + $0x2c] sm:$0xf]
  %v31 = vld [vmem:[%s1 + $0x30] sm:$0xf]
  %v32 = vld [vmem:[%s1 + $0x34] sm:$0xf]
  %v33 = vld [vmem:[%s1 + $0x38] sm:$0xf]
  %v34 = vld [vmem:[%s1 + $0x3c] sm:$0xf]
  %v35 = vld [vmem:[%s1 + $0x40] sm:$0xf]
  %v36 = vld [vmem:[%s1 + $0x44] sm:$0xf]
  %v37 = vld [vmem:[%s1 + $0x48] sm:$0xf]
  %v38 = vld [vmem:[%s1 + $0x4c] sm:$0xf]
  %v39 = vld [vmem:[%s1 + $0x50] sm:$0xf]
  %v40 = vld [vmem:[%s1 + $0x54] sm:$0xf]
  %v41 = vld [vmem:[%s1 + $0x58] sm:$0xf]
  %v42 = vld [vmem:[%s1 + $0x5c] sm:$0xf]
  %v43 = vld [vmem:[%s1 + $0x60] sm:$0xf]
  %v44 = vld [vmem:[%s1 + $0x64] sm:$0xf]
  %v45 = vld [vmem:[%s1 + $0x68] sm:$0xf]
  %v46 = vld [vmem:[%s1 + $0x6c] sm:$0xf]
  %v47 = vld [vmem:[%s1 + $0x70] sm:$0xf]
  %v48 = vld [vmem:[%s1 + $0x74] sm:$0xf]
  %v49 = vld [vmem:[%s1 + $0x78] sm:$0xf]
  %v50 = vld [vmem:[%s1 + $0x7c] sm:$0xf]
  %v51 = vld [vmem:[%s2] sm:$0x1]
  %v53 = vlaneseq
  %v54 = vshrl.u32 %v53, 7
  %v55 = vsub.s32 0, %v54
  %v56 = vrot.slane %v51, %v55
  %v90 = vunpack.c.l.b16 %v19
  %v91 = vunpack.c.l.b16 %v20
  %v92 = vunpack.c.l.b16 %v21
  %v93 = vunpack.c.l.b16 %v22
  %v94 = vunpack.c.l.b16 %v23
  %v95 = vunpack.c.l.b16 %v24
  %v96 = vunpack.c.l.b16 %v25
  %v97 = vunpack.c.l.b16 %v26
  %v98 = vunpack.c.l.b16 %v27
  %v99 = vunpack.c.l.b16 %v28
  %v100 = vunpack.c.l.b16 %v29
  %v101 = vunpack.c.l.b16 %v30
  %v102 = vunpack.c.l.b16 %v31
  %v103 = vunpack.c.l.b16 %v32
  %v104 = vunpack.c.l.b16 %v33
  %v105 = vunpack.c.l.b16 %v34
  %v106 = vunpack.c.l.b16 %v35
  %v107 = vunpack.c.l.b16 %v36
  %v108 = vunpack.c.l.b16 %v37
  %v109 = vunpack.c.l.b16 %v38
  %v110 = vunpack.c.l.b16 %v39
  %v111 = vunpack.c.l.b16 %v40
  %v112 = vunpack.c.l.b16 %v41
  %v113 = vunpack.c.l.b16 %v42
  %v114 = vunpack.c.l.b16 %v43
  %v115 = vunpack.c.l.b16 %v44
  %v116 = vunpack.c.l.b16 %v45
  %v117 = vunpack.c.l.b16 %v46
  %v118 = vunpack.c.l.b16 %v47
  %v119 = vunpack.c.l.b16 %v48
  %v120 = vunpack.c.l.b16 %v49
  %v121 = vunpack.c.l.b16 %v50
  %v122 = vpack.c.b16 %v91, %v90
  %v123 = vpack.c.b16 %v93, %v92
  %v124 = vpack.c.b16 %v95, %v94
  %v125 = vpack.c.b16 %v97, %v96
  %v126 = vpack.c.b16 %v99, %v98
  %v127 = vpack.c.b16 %v101, %v100
  %v128 = vpack.c.b16 %v103, %v102
  %v129 = vpack.c.b16 %v105, %v104
  %v130 = vpack.c.b16 %v107, %v106
  %v131 = vpack.c.b16 %v109, %v108
  %v132 = vpack.c.b16 %v111, %v110
  %v133 = vpack.c.b16 %v113, %v112
  %v134 = vpack.c.b16 %v115, %v114
  %v135 = vpack.c.b16 %v117, %v116
  %v136 = vpack.c.b16 %v119, %v118
  %v137 = vpack.c.b16 %v121, %v120
  %154 = vmatprep.subr.bf16.mxu0 0
  %155 = vmatpush1.bf16.msra.mxu0 %v129
  %156 = vmatprep.subr.bf16.mxu0 0
  %157 = vmatpush1.bf16.msra.mxu0 %v128
  %158 = vmatprep.subr.bf16.mxu0 0
  %159 = vmatpush1.bf16.msra.mxu0 %v127
  %160 = vmatprep.subr.bf16.mxu0 0
  %161 = vmatpush1.bf16.msra.mxu0 %v126
  %162 = vmatprep.subr.bf16.mxu0 0
  %163 = vmatpush1.bf16.msra.mxu0 %v125
  %164 = vmatprep.subr.bf16.mxu0 0
  %165 = vmatpush1.bf16.msra.mxu0 %v124
  %166 = vmatprep.subr.bf16.mxu0 0
  %167 = vmatpush1.bf16.msra.mxu0 %v123
  %168 = vmatprep.subr.bf16.mxu0 0
  %169 = vmatpush1.bf16.msra.mxu0 %v122
  %170 = vmatprep.subr.bf16.mxu0 0
  %171 = vmatpush2.bf16.msra.mxu0 %v137
  %172 = vmatprep.subr.bf16.mxu0 0
  %173 = vmatpush2.bf16.msra.mxu0 %v136
  %174 = vmatprep.subr.bf16.mxu0 0
  %175 = vmatpush2.bf16.msra.mxu0 %v135
  %176 = vmatprep.subr.bf16.mxu0 0
  %177 = vmatpush2.bf16.msra.mxu0 %v134
  %178 = vmatprep.subr.bf16.mxu0 0
  %179 = vmatpush2.bf16.msra.mxu0 %v133
  %180 = vmatprep.subr.bf16.mxu0 0
  %181 = vmatpush2.bf16.msra.mxu0 %v132
  %182 = vmatprep.subr.bf16.mxu0 0
  %183 = vmatpush2.bf16.msra.mxu0 %v131
  %184 = vmatprep.subr.bf16.mxu0 0
  %185 = vmatpush2.bf16.msra.mxu0 %v130
  %186 = vmatprep.mubr.bf16.mxu0 %v18
  %187 = vmatmul.mubr.bf16.gmra.mxu0 %v17
  %v188 = vpop.f32.mrf.mxu0
  %v189 = vadd.f32 %v56, %v188
  %v190 = vpop.f32.mrf.mxu0
  %v191 = vpop.f32.mrf.mxu0
  %v192 = vpop.f32.mrf.mxu0
  %193 = vdwg.mxu0
  %194 = vst [vmem:[%s3] sm:$0xff] %v189
  // Predicated region
  $region14: #{baseline_forward.1} parent=0 // pred_check
    _
  $region15: #{baseline_forward.1} parent=0 // pred_check_branch
    %196 = sbr.rel (0) target = $region17
  $region16: #{baseline_forward.1} parent=0 // pred_region
    _
  $region17: #{baseline_forward.1} parent=0 // pred_fallthru
    _
  // Predicated region
  $region18: #{baseline_forward.1} parent=0 // pred_check
    _
  $region19: #{baseline_forward.1} parent=0 // pred_check_branch
    %198 = sbr.rel (0) target = $region21
  $region20: #{baseline_forward.1} parent=0 // pred_region
    _
  $region21: #{baseline_forward.1} parent=0 // pred_fallthru
    _

</llo_original>
